<compile_context>
chip_gen: v5e
topology: v5e:2x2
jax: 0.10.0
libtpu: 0.0.40
codegen_flags: <defaults>
</compile_context>

<pallas_src>
import functools
import math

import jax
import jax.numpy as jnp
from jax.experimental import pallas as pl
from jax.experimental.pallas import tpu as pltpu


# ----------------------------- kernels --------------------------------------

def _pe_add_kernel(x_ref, pe_ref, o_ref):
    # x_ref: (TS, B, D); pe_ref: (TS, 1, D) broadcasts over the batch (sublane) axis.
    o_ref[...] = (x_ref[...] + pe_ref[...]).astype(o_ref.dtype)


def _pe_add_dropout_kernel(x_ref, pe_ref, u_ref, o_ref, *, p):
    # Inverted dropout: keep each element with prob (1-p), scale kept by 1/(1-p).
    y = x_ref[...] + pe_ref[...]
    keep = u_ref[...] >= jnp.float32(p)
    scale = jnp.asarray(1.0 / (1.0 - p), y.dtype)
    o_ref[...] = jnp.where(keep, y * scale, jnp.zeros_like(y)).astype(o_ref.dtype)


# ----------------------------- parameter setup -------------------------------

def make_positional_encoding_table(d_model, max_len=256, dtype=jnp.float32):
    """Replicates the PyTorch __init__ buffer construction (pe: (max_len, 1, d_pad)).

    Note: this module pads odd d_model to d_pad = d_model + 1 and uses d_pad in
    the div_term denominator (exactly as the PyTorch code does); the forward
    slice [:, :, :d_model] then drops the pad column.
    """
    d_pad = d_model + 1 if d_model % 2 == 1 else d_model
    position = jnp.arange(max_len, dtype=jnp.float32)[:, None]              # (L, 1)
    div_term = jnp.exp(
        jnp.arange(0, d_pad, 2, dtype=jnp.float32) * (-math.log(10000.0) / d_pad)
    )                                                                        # (d_pad/2,)
    pe = jnp.zeros((max_len, d_pad), dtype=jnp.float32)
    pe = pe.at[:, 0::2].set(jnp.sin(position * div_term))
    pe = pe.at[:, 1::2].set(jnp.cos(position * div_term))
    return pe[:, None, :].astype(dtype)                                      # (L, 1, d_pad)


# ----------------------------- wrapper ---------------------------------------

def _choose_seq_block(seq_len, bytes_per_position, target_bytes=1 << 20):
    """Sequence tile: a multiple of 8 (or the full seq) sized to ~target_bytes/block."""
    if seq_len <= 8:
        return seq_len
    ts = (target_bytes // max(bytes_per_position, 1)) // 8 * 8
    ts = max(8, ts)
    return int(min(ts, (seq_len // 8) * 8))


def positional_encoding_forward(x, pe, d_model, *, p=0.1, training=False,
                                rng=None, seq_block=None):
    """x: (S, B, d_model); pe: (max_len, 1, d_pad). Returns (S, B, d_model)."""
    S, B, D = x.shape
    assert D == d_model, (D, d_model)
    assert pe.shape[0] >= S and pe.shape[2] >= d_model

    # NOTE: for KB-scale tensors a plain fused XLA `x + pe` would beat any
    # custom call (launch + per-step overhead dominates); we always take the
    # Pallas path here so the kernel is exercised.
    pe_slice = pe[:S, :, :d_model].astype(x.dtype)          # (S, 1, D), x.dtype

    if training and p >= 1.0:                               # degenerate: drop everything
        return jnp.zeros_like(x)

    itemsize = x.dtype.itemsize
    ts = seq_block if seq_block is not None else _choose_seq_block(S, B * D * itemsize)
    ts = int(min(ts, S))
    grid = (pl.cdiv(S, ts),)                                # uneven final block is masked

    # Last two block dims are the full array dims -> contiguous DMA, no (8,128)
    # divisibility issues for any B / d_model.
    x_spec = pl.BlockSpec((ts, B, D), lambda i: (i, 0, 0))
    pe_spec = pl.BlockSpec((ts, 1, D), lambda i: (i, 0, 0))
    out_spec = pl.BlockSpec((ts, B, D), lambda i: (i, 0, 0))

    compiler_params = pltpu.CompilerParams(
        dimension_semantics=("parallel",),                  # both TCs on v7x
        vmem_limit_bytes=32 * 1024 * 1024,                  # blocks are ~1 MiB each
    )
    # TODO(synk): for extreme B*d_model (>~32 MiB per 8 sequence rows) add a
    # second batch-tiling grid axis; not needed for this module's typical shapes.

    use_dropout = bool(training) and p > 0.0
    if use_dropout:
        if rng is None:
            rng = jax.random.PRNGKey(0)
        # Mask drawn outside the kernel (portable: no TPU-only PRNG primitives),
        # thresholded and applied inside the kernel.
        u = jax.random.uniform(rng, x.shape, dtype=jnp.float32)
        kernel = functools.partial(_pe_add_dropout_kernel, p=float(p))
        in_specs = [x_spec, pe_spec, pl.BlockSpec((ts, B, D), lambda i: (i, 0, 0))]
        operands = (x, pe_slice, u)
    else:
        kernel = _pe_add_kernel
        in_specs = [x_spec, pe_spec]
        operands = (x, pe_slice)

    return pl.pallas_call(
        kernel,
        out_shape=jax.ShapeDtypeStruct((S, B, D), x.dtype),
        grid=grid,
        in_specs=in_specs,
        out_specs=out_spec,
        input_output_aliases={0: 0},                        # x -> out (elementwise)
        compiler_params=compiler_params,
    )(*operands)


# ----------------------------- demo / checks ---------------------------------

if __name__ == "__main__":
    max_len = 256

    # --- Case 1: small demo shapes (S=8, B=2, d_model=32), eval mode --------
    d_model, seq_len, batch = 32, 8, 2
    key = jax.random.PRNGKey(0)
    k1, k2 = jax.random.split(key)
    x = jax.random.normal(k1, (seq_len, batch, d_model), dtype=jnp.float32)
    pe = make_positional_encoding_table(d_model, max_len=max_len)

    out = positional_encoding_forward(x, pe, d_model, p=0.1, training=False)
    out = jax.block_until_ready(out)
    ref = x + pe[:seq_len, :, :d_model]
    assert out.shape == x.shape
    assert jnp.allclose(out, ref, atol=1e-6, rtol=1e-6), "eval-mode mismatch"

    # --- Case 2: multi-block tiled path (grid > 1, uneven final block) ------
    d2, s2, b2 = 128, 28, 4
    x2 = jax.random.normal(k2, (s2, b2, d2), dtype=jnp.float32)
    pe2 = make_positional_encoding_table(d2, max_len=max_len)
    out2 = jax.block_until_ready(
        positional_encoding_forward(x2, pe2, d2, training=False, seq_block=8))
    ref2 = x2 + pe2[:s2, :, :d2]
    assert jnp.allclose(out2, ref2, atol=1e-6, rtol=1e-6), "tiled-path mismatch"

    # --- Case 3: training-mode dropout (mask applied in-kernel) -------------
    p = 0.1
    out_tr = jax.block_until_ready(
        positional_encoding_forward(x, pe, d_model, p=p, training=True,
                                    rng=jax.random.PRNGKey(42)))
    scaled = ref / (1.0 - p)
    ok = jnp.all(jnp.isclose(out_tr, 0.0) |
                 jnp.isclose(out_tr, scaled, atol=1e-5, rtol=1e-5))
    assert bool(ok), "training-mode dropout values must be 0 or scaled (x + pe)"
    frac_dropped = float(jnp.mean((out_tr == 0.0).astype(jnp.float32)))
    assert frac_dropped < 0.5, "dropout rate implausibly high for p=0.1"

    print("KERNEL_OK")
</pallas_src>

<mosaic_0001>
module attributes {stable_mosaic.version = 11 : i64} {
  func.func @_pe_add_kernel(%arg0: i32, %arg1: memref<8x2x32xf32, #tpu.memory_space<vmem>>, %arg2: memref<8x1x32xf32, #tpu.memory_space<vmem>>, %arg3: memref<8x2x32xf32, #tpu.memory_space<vmem>>) attributes {dimension_semantics = [#tpu.dimension_semantics<parallel>], iteration_bounds = array<i64: 1>, scalar_prefetch = 0 : i64, scratch_operands = 0 : i64, tpu.core_type = #tpu.core_type<tc>, window_params = [{transform_indices = @transform_0, window_bounds = array<i64: 8, 2, 32>}, {transform_indices = @transform_1, window_bounds = array<i64: 8, 1, 32>}, {transform_indices = @transform_2, window_bounds = array<i64: 8, 2, 32>}]} {
    %c0 = arith.constant 0 : index
    %c0_0 = arith.constant 0 : index
    %c0_1 = arith.constant 0 : index
    %0 = vector.load %arg1[%c0, %c0_0, %c0_1] : memref<8x2x32xf32, #tpu.memory_space<vmem>>, vector<8x2x32xf32>
    %c0_2 = arith.constant 0 : index
    %c0_3 = arith.constant 0 : index
    %c0_4 = arith.constant 0 : index
    %1 = vector.load %arg2[%c0_2, %c0_3, %c0_4] : memref<8x1x32xf32, #tpu.memory_space<vmem>>, vector<8x1x32xf32>
    %2 = vector.broadcast %1 : vector<8x1x32xf32> to vector<8x2x32xf32>
    %3 = arith.addf %0, %2 : vector<8x2x32xf32>
    %c0_5 = arith.constant 0 : index
    %c0_6 = arith.constant 0 : index
    %c0_7 = arith.constant 0 : index
    %4 = vector.load %arg3[%c0_5, %c0_6, %c0_7] : memref<8x2x32xf32, #tpu.memory_space<vmem>>, vector<8x2x32xf32>
    tpu.vector_store %arg3[%c0_5, %c0_6, %c0_7], %3 {strides = array<i32>} : memref<8x2x32xf32, #tpu.memory_space<vmem>>, vector<8x2x32xf32>,
    return
  }
  func.func @transform_0(%arg0: i32) -> (i32, i32, i32) {
    %c0_i32 = arith.constant 0 : i32
    %c0_i32_0 = arith.constant 0 : i32
    %c0_i32_1 = arith.constant 0 : i32
    return %arg0, %c0_i32, %c0_i32_0 : i32, i32, i32
  }
  func.func @transform_1(%arg0: i32) -> (i32, i32, i32) {
    %c0_i32 = arith.constant 0 : i32
    %c0_i32_0 = arith.constant 0 : i32
    %c0_i32_1 = arith.constant 0 : i32
    return %arg0, %c0_i32, %c0_i32_0 : i32, i32, i32
  }
  func.func @transform_2(%arg0: i32) -> (i32, i32, i32) {
    %c0_i32 = arith.constant 0 : i32
    %c0_i32_0 = arith.constant 0 : i32
    %c0_i32_1 = arith.constant 0 : i32
    return %arg0, %c0_i32, %c0_i32_0 : i32, i32, i32
  }
}

</mosaic_0001>

<llo_original>
// kernel: tpu_custom_call.1
$region0: #{tpu_custom_call.1}
  #allocation0 [shape = 'u32[]', space=smem, size = 0x4, offset = 0x4, fixed_abs, tag = 'smem constant byte address 0x4 - core index']
  #allocation1 [shape = 'u32[72,128]{1,0:T(1,128)}', space=vmem, size = 0x9000, scoped, tag = 'internal scratch']
  %s0 = inlined_call_operand.hbm [shape: f32[8,2,32], index: 0, kind: input, shape index: {}, may-alias: {0,2}]
  %s1 = inlined_call_operand.vmem [shape: f32[8,1,32], index: 1, kind: input, shape index: {}]
  %s2 = inlined_call_operand.hbm [shape: f32[8,2,32], index: 2, kind: output, shape index: {}, may-alias: {0,2}]
  %s3 = sld [smem:[#allocation0]]
  $region22: #{tpu_custom_call.1} parent=0
    _
  %s5 = ssub.s32 1, %s3
  %s6 = scalar_select 0, %s5, %s3
  $region1: #{tpu_custom_call.1} parent=0
    #allocation2 [shape = 'u8[8192]{0}', space=vmem, size = 0x2000, scoped, tag = 'input window, operand 0, single buffered']
    #allocation3 [shape = 's32[1]{0}', space=sflag, size = 0x4, scoped, tag = 'scoped memory for tpu_custom_call.1']
    #allocation4 [shape = 's32[1]{0}', space=sflag, size = 0x4, scoped, tag = 'scoped memory for tpu_custom_call.1']
    #allocation5 [shape = 'u8[8192]{0}', space=vmem, size = 0x2000, scoped, tag = 'output window, operand 0, single buffered']
    %7 = vsyncpa [#allocation3], 0
    %8 = vsyncpa [#allocation4], 0
    // Predicated region
    $region2: #{tpu_custom_call.1} parent=1 // pred_check
      _
    $region3: #{tpu_custom_call.1} parent=1 // pred_check_branch
      %10 = sbr.rel (0) target = $region5
    $region4: #{tpu_custom_call.1} parent=1 // pred_region
      %12 = vsyncadd [#allocation3], 0
      %s13 = sshll.u32 %s0, 4
      %s14 = int_to_ptr.hbm [resolvable:$true] %s13
      %s15 = sshll.u32 [#allocation2], 4
      %s16 = int_to_ptr.vmem [resolvable:$true] %s15
      %21 = dma.hbm_to_vmem [thread:$0]  %s14, 256, %s16, [#allocation3], 32, 32, 2
    $region5: #{tpu_custom_call.1} parent=1 // pred_fallthru
      _
    // Predicated region
    $region6: #{tpu_custom_call.1} parent=1 // pred_check
      _
    $region7: #{tpu_custom_call.1} parent=1 // pred_check_branch
      %23 = sbr.rel (0) target = $region9
    $region8: #{tpu_custom_call.1} parent=1 // pred_region
      _
    $region9: #{tpu_custom_call.1} parent=1 // pred_fallthru
      _
    // Predicated region
    $region10: #{tpu_custom_call.1} parent=1 // pred_check
      _
    $region11: #{tpu_custom_call.1} parent=1 // pred_check_branch
      %25 = sbr.rel (0) target = $region13
    $region12: #{tpu_custom_call.1} parent=1 // pred_region
      %27 = dma.done [#allocation3], 256
    $region13: #{tpu_custom_call.1} parent=1 // pred_fallthru
      _
    %v28 = vld [vmem:[#allocation2] sm:$0x3]
    %v29 = vld [vmem:[#allocation2 + $0x2] sm:$0x3]
    %v30 = vld [vmem:[#allocation2 + $0x4] sm:$0x3]
    %v31 = vld [vmem:[#allocation2 + $0x6] sm:$0x3]
    %v32 = vld [vmem:[#allocation2 + $0x8] sm:$0x3]
    %v33 = vld [vmem:[#allocation2 + $0xa] sm:$0x3]
    %v34 = vld [vmem:[#allocation2 + $0xc] sm:$0x3]
    %v35 = vld [vmem:[#allocation2 + $0xe] sm:$0x3]
    %v36 = vld [vmem:[%s1] sm:$0x1]
    %v37 = vld [vmem:[%s1 + $0x1] sm:$0x1]
    %v38 = vld [vmem:[%s1 + $0x2] sm:$0x1]
    %v39 = vld [vmem:[%s1 + $0x3] sm:$0x1]
    %v40 = vld [vmem:[%s1 + $0x4] sm:$0x1]
    %v41 = vld [vmem:[%s1 + $0x5] sm:$0x1]
    %v42 = vld [vmem:[%s1 + $0x6] sm:$0x1]
    %v43 = vld [vmem:[%s1 + $0x7] sm:$0x1]
    %v52 = vperm.slane %v36, 0
    %v53 = vperm.slane %v37, 0
    %v54 = vperm.slane %v38, 0
    %v55 = vperm.slane %v39, 0
    %v56 = vperm.slane %v40, 0
    %v57 = vperm.slane %v41, 0
    %v58 = vperm.slane %v42, 0
    %v59 = vperm.slane %v43, 0
    %v68 = vadd.f32 %v28, %v52
    %v69 = vadd.f32 %v29, %v53
    %v70 = vadd.f32 %v30, %v54
    %v71 = vadd.f32 %v31, %v55
    %v72 = vadd.f32 %v32, %v56
    %v73 = vadd.f32 %v33, %v57
    %v74 = vadd.f32 %v34, %v58
    %v75 = vadd.f32 %v35, %v59
    %vm76 = vcmask 254976
    %77 = vst.msk [vmem:[#allocation5] sm:$0x3] %vm76, %v68
    %78 = vst.msk [vmem:[#allocation5 + $0x2] sm:$0x3] %vm76, %v69
    %79 = vst.msk [vmem:[#allocation5 + $0x4] sm:$0x3] %vm76, %v70
    %80 = vst.msk [vmem:[#allocation5 + $0x6] sm:$0x3] %vm76, %v71
    %81 = vst.msk [vmem:[#allocation5 + $0x8] sm:$0x3] %vm76, %v72
    %82 = vst.msk [vmem:[#allocation5 + $0xa] sm:$0x3] %vm76, %v73
    %83 = vst.msk [vmem:[#allocation5 + $0xc] sm:$0x3] %vm76, %v74
    %84 = vst.msk [vmem:[#allocation5 + $0xe] sm:$0x3] %vm76, %v75
    // Predicated region
    $region14: #{tpu_custom_call.1} parent=1 // pred_check
      _
    $region15: #{tpu_custom_call.1} parent=1 // pred_check_branch
      %86 = sbr.rel (0) target = $region17
    $region16: #{tpu_custom_call.1} parent=1 // pred_region
      %88 = vsyncadd [#allocation4], 0
      %s89 = sshll.u32 [#allocation5], 4
      %s90 = int_to_ptr.vmem [resolvable:$true] %s89
      %s91 = sshll.u32 %s2, 4
      %s92 = int_to_ptr.hbm [resolvable:$true] %s91
      %97 = dma.vmem_to_hbm [thread:$0]  %s90, 256, %s92, [#allocation4], 32, 32, 2
    $region17: #{tpu_custom_call.1} parent=1 // pred_fallthru
      _
    // Predicated region
    $region18: #{tpu_custom_call.1} parent=1 // pred_check
      _
    $region19: #{tpu_custom_call.1} parent=1 // pred_check_branch
      %99 = sbr.rel (0) target = $region21
    $region20: #{tpu_custom_call.1} parent=1 // pred_region
      %101 = dma.done [#allocation4], 256
    $region21: #{tpu_custom_call.1} parent=1 // pred_fallthru
      _
    %102 = vsyncpa [#allocation3], 1
    %103 = vsyncpa [#allocation4], 1

</llo_original>
